<compile_context>
chip_gen: v5e
topology: v5e:2x2
jax: 0.10.0
libtpu: 0.0.40
codegen_flags: <defaults>
</compile_context>

<pallas_src>
import functools

import jax
import jax.numpy as jnp
from jax.experimental import pallas as pl
from jax.experimental.pallas import tpu as pltpu


def _round_up(x, m):
    return ((x + m - 1) // m) * m


def _vmem_capacity_bytes():
    """Trace-time VMEM capacity query with a conservative (v7x) fallback."""
    try:
        info = pltpu.get_tpu_info()
        cap = getattr(info, "vmem_capacity_bytes", None)
        if cap:
            return int(cap)
    except Exception:
        pass
    return 64 << 20


def _choose_tile_n(c, in_itemsize):
    """Pick a row tile and VMEM limit from an honest per-row VMEM footprint."""
    c_lanes = _round_up(c, 128)  # VMEM lane-pads the class axis to 128 lanes.
    # Per row of a tile:
    #   2 inputs x 2 pipeline buffers x c_lanes x itemsize   (BlockSpec double buffering)
    # + ~4 full-width f32 temporaries alive during compute (x_f32, exp(x-m), selects)
    # + double-buffered (1, tile_n) f32 output (negligible, counted anyway).
    per_row = 4 * c_lanes * in_itemsize + 4 * c_lanes * 4 + 8

    vmem_cap = _vmem_capacity_bytes()
    vmem_limit = min(vmem_cap // 2, 64 << 20)   # 32 MiB on v7x, 64 MiB on v5e/v6e
    tile_budget = vmem_limit // 2               # leave headroom for compiler scratch

    tile = tile_budget // per_row
    tile = int(min(tile, 16384))
    tile = max(128, (tile // 128) * 128)        # multiple of 128 for lane-dense output
    return tile, vmem_limit


def _reweighting_ce_kernel(x_ref, t_ref, loss_ref, *, n_rows):
    # x_ref, t_ref: (tile_n, C) in VMEM ; loss_ref: (1, tile_n) lane-major.
    x = x_ref[...]
    t = t_ref[...]                 # keep target in its native dtype (no full upcast)
    rows, C = x.shape

    xf = x.astype(jnp.float32)

    # ---- stabilized logsumexp along the class axis (no log-softmax tensor) ----
    m = jnp.max(xf, axis=1, keepdims=True)                           # (rows, 1)
    s = jnp.sum(jnp.exp(xf - m), axis=1, keepdims=True)              # (rows, 1)
    lse = m + jnp.log(s)                                             # (rows, 1)

    # ---- argmax(target, axis=1) with first-occurrence tie-break (torch.argmax) ----
    iota = jax.lax.broadcasted_iota(jnp.int32, (rows, C), 1)
    tmax = jnp.max(t, axis=1, keepdims=True)
    first_idx = jnp.min(jnp.where(t == tmax, iota, C), axis=1, keepdims=True)

    # selected logit; per-row CE = lse - x[argmax]  (one fused select+reduce)
    x_sel = jnp.sum(jnp.where(iota == first_idx, xf, 0.0), axis=1, keepdims=True)

    # ---- per-row weights: 1 where target[:, 0] == 1 else -target[:, 0] ----
    t0 = t[:, 0:1].astype(jnp.float32)
    w = jnp.where(t0 == 1.0, 1.0, -t0)                               # (rows, 1)

    row_loss = (lse - x_sel) * w                                     # (rows, 1)

    # ---- mask garbage rows of the ragged last block (MUST stay a select) ----
    row_id = pl.program_id(0) * rows + jax.lax.broadcasted_iota(
        jnp.int32, (rows, 1), 0)
    masked = jnp.where(row_id < n_rows, row_loss, 0.0)

    # ---- lane-major store: (rows, 1) column -> (1, rows) lane vector ----
    loss_ref[...] = jnp.reshape(masked, (1, rows))


def reweighting_ce(inputs, target, reduction="mean", tile_n=None):
    """Pallas implementation of ReweightingCE.forward (one_hot_gt_or_pseudo=None).

    Feed `inputs`/`target` as bf16 when the caller can tolerate it: the kernel
    upcasts internally and HBM read volume halves.
    """
    # TODO(synk): the one_hot_gt_or_pseudo == 'ce' branch uses boolean-mask
    # gathers with data-dependent output sizes (torch.cat of masked slices);
    # only the default (None) path is implemented here.
    N, C = inputs.shape
    assert target.shape == (N, C)

    in_itemsize = max(jnp.dtype(inputs.dtype).itemsize,
                      jnp.dtype(target.dtype).itemsize)
    auto_tile, vmem_limit = _choose_tile_n(C, in_itemsize)
    if tile_n is None:
        tile_n = auto_tile
    tile_n = int(tile_n)

    if N <= tile_n:
        # Single block covering the full arrays: no alignment constraints.
        tile_n = N
        grid = (1,)
    else:
        tile_n = max(128, (tile_n // 128) * 128)
        grid = (pl.cdiv(N, tile_n),)   # no padding; last block may be ragged

    kernel = functools.partial(_reweighting_ce_kernel, n_rows=N)

    per_row = pl.pallas_call(
        kernel,
        out_shape=jax.ShapeDtypeStruct((1, N), jnp.float32),
        grid_spec=pltpu.PrefetchScalarGridSpec(
            num_scalar_prefetch=0,
            grid=grid,
            in_specs=[
                pl.BlockSpec((tile_n, C), lambda i: (i, 0)),
                pl.BlockSpec((tile_n, C), lambda i: (i, 0)),
            ],
            out_specs=pl.BlockSpec((1, tile_n), lambda i: (0, i)),
        ),
        compiler_params=pltpu.CompilerParams(
            dimension_semantics=("parallel",),
            vmem_limit_bytes=vmem_limit,
        ),
    )(inputs, target)

    if reduction == "none":
        return per_row[0]
    elif reduction == "sum":
        return jnp.sum(per_row)
    elif reduction == "mean":
        return jnp.sum(per_row) / N
    else:
        raise ValueError(
            "unrecognized option, expect reduction to be one of none, mean, sum")


def _reference(inputs, target, reduction="mean"):
    """Pure-JAX reference mirroring the PyTorch forward."""
    inputs = inputs.astype(jnp.float32)
    target = target.astype(jnp.float32)
    final_target = jax.nn.one_hot(jnp.argmax(target, axis=1), target.shape[1],
                                  dtype=jnp.float32)
    t0 = target[:, 0]
    weights = jnp.where(t0 == 1.0, jnp.ones_like(t0), -t0)
    x = jax.nn.log_softmax(inputs, axis=1)
    loss = jnp.sum(-x * final_target, axis=1) * weights
    if reduction == "none":
        return loss
    if reduction == "sum":
        return jnp.sum(loss)
    return jnp.mean(loss)


def _make_data(key, n, c, dtype=jnp.float32):
    k1, k2 = jax.random.split(key)
    inputs = jax.random.normal(k1, (n, c), dtype=jnp.float32)
    # Soft-label target: row-wise softmax of random logits (pseudo labels),
    # with a couple of rows forced to exact background one-hot ([1, 0, 0, ...]).
    raw = jax.random.normal(k2, (n, c), dtype=jnp.float32)
    soft = jax.nn.softmax(raw, axis=1)
    bg_onehot = jnp.zeros((c,), jnp.float32).at[0].set(1.0)
    target = soft.at[0].set(bg_onehot).at[min(3, n - 1)].set(bg_onehot)
    return inputs.astype(dtype), target.astype(dtype)


if __name__ == "__main__":
    key = jax.random.PRNGKey(0)
    k_a, k_b, k_c, k_d = jax.random.split(key, 4)

    # Test 1: small f32, reduction='mean' (8 samples, 32 relation classes).
    inp, tgt = _make_data(k_a, 8, 32, jnp.float32)
    out = jax.block_until_ready(reweighting_ce(inp, tgt, reduction="mean"))
    ref = _reference(inp, tgt, reduction="mean")
    assert jnp.allclose(out, ref, atol=1e-5, rtol=1e-5), (out, ref)

    # Test 2: N not a multiple of 8, 'none' and 'sum'.
    inp, tgt = _make_data(k_b, 37, 32, jnp.float32)
    out_none = jax.block_until_ready(reweighting_ce(inp, tgt, reduction="none"))
    ref_none = _reference(inp, tgt, reduction="none")
    assert out_none.shape == (37,)
    assert jnp.allclose(out_none, ref_none, atol=1e-5, rtol=1e-5)
    out_sum = jax.block_until_ready(reweighting_ce(inp, tgt, reduction="sum"))
    ref_sum = _reference(inp, tgt, reduction="sum")
    assert jnp.allclose(out_sum, ref_sum, atol=1e-4, rtol=1e-4)

    # Test 3: forced small tile -> multi-tile grid with a ragged last block
    # (exercises the no-pad path, the in-kernel row mask and lane-major stores).
    inp, tgt = _make_data(k_c, 300, 32, jnp.float32)
    out_none = jax.block_until_ready(
        reweighting_ce(inp, tgt, reduction="none", tile_n=128))
    ref_none = _reference(inp, tgt, reduction="none")
    assert out_none.shape == (300,)
    assert jnp.allclose(out_none, ref_none, atol=1e-5, rtol=1e-5)
    out_mean = jax.block_until_ready(
        reweighting_ce(inp, tgt, reduction="mean", tile_n=128))
    ref_mean = _reference(inp, tgt, reduction="mean")
    assert jnp.allclose(out_mean, ref_mean, atol=1e-5, rtol=1e-5)

    # Test 4: bf16 inputs/targets (halves HBM traffic); kernel upcasts internally.
    inp, tgt = _make_data(k_d, 64, 32, jnp.bfloat16)
    out_bf = jax.block_until_ready(reweighting_ce(inp, tgt, reduction="mean"))
    ref_bf = _reference(inp, tgt, reduction="mean")
    assert jnp.allclose(out_bf, ref_bf, atol=2e-2, rtol=2e-2), (out_bf, ref_bf)

    print("KERNEL_OK")
</pallas_src>

<mosaic_0001>
module attributes {stable_mosaic.version = 11 : i64} {
  func.func @_reweighting_ce_kernel(%arg0: i32, %arg1: memref<8x32xf32, #tpu.memory_space<vmem>>, %arg2: memref<8x32xf32, #tpu.memory_space<vmem>>, %arg3: memref<1x8xf32, #tpu.memory_space<vmem>>) attributes {dimension_semantics = [#tpu.dimension_semantics<parallel>], iteration_bounds = array<i64: 1>, scalar_prefetch = 0 : i64, scratch_operands = 0 : i64, tpu.core_type = #tpu.core_type<tc>, window_params = [{transform_indices = @transform_0, window_bounds = array<i64: 8, 32>}, {transform_indices = @transform_1, window_bounds = array<i64: 8, 32>}, {transform_indices = @transform_2, window_bounds = array<i64: 1, 8>}]} {
    %c0 = arith.constant 0 : index
    %c0_0 = arith.constant 0 : index
    %0 = vector.load %arg1[%c0, %c0_0] : memref<8x32xf32, #tpu.memory_space<vmem>>, vector<8x32xf32>
    %c0_1 = arith.constant 0 : index
    %c0_2 = arith.constant 0 : index
    %1 = vector.load %arg2[%c0_1, %c0_2] : memref<8x32xf32, #tpu.memory_space<vmem>>, vector<8x32xf32>
    %cst = arith.constant dense<0xFF800000> : vector<8xf32>
    %2 = vector.multi_reduction <maximumf>, %0, %cst [1] : vector<8x32xf32> to vector<8xf32>
    %3 = vector.shape_cast %2 : vector<8xf32> to vector<8x1xf32>
    %4 = vector.broadcast %3 : vector<8x1xf32> to vector<8x32xf32>
    %5 = arith.subf %0, %4 : vector<8x32xf32>
    %6 = math.exp %5 : vector<8x32xf32>
    %cst_3 = arith.constant dense<0.000000e+00> : vector<8xf32>
    %7 = vector.multi_reduction <add>, %6, %cst_3 [1] : vector<8x32xf32> to vector<8xf32>
    %8 = vector.shape_cast %7 : vector<8xf32> to vector<8x1xf32>
    %9 = math.log %8 : vector<8x1xf32>
    %10 = arith.addf %3, %9 : vector<8x1xf32>
    %11 = tpu.iota {dimensions = array<i32: 1>} : vector<8x32xi32>
    %cst_4 = arith.constant dense<0xFF800000> : vector<8xf32>
    %12 = vector.multi_reduction <maximumf>, %1, %cst_4 [1] : vector<8x32xf32> to vector<8xf32>
    %13 = vector.shape_cast %12 : vector<8xf32> to vector<8x1xf32>
    %14 = vector.broadcast %13 : vector<8x1xf32> to vector<8x32xf32>
    %15 = arith.cmpf oeq, %1, %14 : vector<8x32xf32>
    %c32_i32 = arith.constant 32 : i32
    %16 = vector.broadcast %c32_i32 : i32 to vector<8x32xi32>
    %17 = arith.select %15, %11, %16 : vector<8x32xi1>, vector<8x32xi32>
    %cst_5 = arith.constant dense<2147483647> : vector<8xi32>
    %18 = vector.multi_reduction <minsi>, %17, %cst_5 [1] : vector<8x32xi32> to vector<8xi32>
    %19 = vector.shape_cast %18 : vector<8xi32> to vector<8x1xi32>
    %20 = vector.broadcast %19 : vector<8x1xi32> to vector<8x32xi32>
    %21 = arith.cmpi eq, %11, %20 : vector<8x32xi32>
    %cst_6 = arith.constant 0.000000e+00 : f32
    %22 = vector.broadcast %cst_6 : f32 to vector<8x32xf32>
    %23 = arith.select %21, %0, %22 : vector<8x32xi1>, vector<8x32xf32>
    %cst_7 = arith.constant dense<0.000000e+00> : vector<8xf32>
    %24 = vector.multi_reduction <add>, %23, %cst_7 [1] : vector<8x32xf32> to vector<8xf32>
    %25 = vector.shape_cast %24 : vector<8xf32> to vector<8x1xf32>
    %26 = vector.extract_strided_slice %1 {offsets = [0, 0], sizes = [8, 1], strides = [1, 1]} : vector<8x32xf32> to vector<8x1xf32>
    %cst_8 = arith.constant 1.000000e+00 : f32
    %27 = vector.broadcast %cst_8 : f32 to vector<8x1xf32>
    %28 = arith.cmpf oeq, %26, %27 : vector<8x1xf32>
    %cst_9 = arith.constant 0.000000e+00 : f32
    %29 = vector.broadcast %cst_9 : f32 to vector<8x1xf32>
    %30 = arith.subf %29, %26 : vector<8x1xf32>
    %cst_10 = arith.constant 1.000000e+00 : f32
    %31 = vector.broadcast %cst_10 : f32 to vector<8x1xf32>
    %32 = arith.select %28, %31, %30 : vector<8x1xi1>, vector<8x1xf32>
    %33 = arith.subf %10, %25 : vector<8x1xf32>
    %34 = arith.mulf %33, %32 : vector<8x1xf32>
    %c8_i32 = arith.constant 8 : i32
    %35 = arith.muli %arg0, %c8_i32 : i32
    %36 = tpu.iota {dimensions = array<i32: 0>} : vector<8x1xi32>
    %37 = vector.broadcast %35 : i32 to vector<8x1xi32>
    %38 = arith.addi %37, %36 : vector<8x1xi32>
    %c8_i32_11 = arith.constant 8 : i32
    %39 = vector.broadcast %c8_i32_11 : i32 to vector<8x1xi32>
    %40 = arith.cmpi slt, %38, %39 : vector<8x1xi32>
    %cst_12 = arith.constant 0.000000e+00 : f32
    %41 = vector.broadcast %cst_12 : f32 to vector<8x1xf32>
    %42 = arith.select %40, %34, %41 : vector<8x1xi1>, vector<8x1xf32>
    %43 = vector.shape_cast %42 : vector<8x1xf32> to vector<1x8xf32>
    %c0_13 = arith.constant 0 : index
    %c0_14 = arith.constant 0 : index
    %44 = vector.load %arg3[%c0_13, %c0_14] : memref<1x8xf32, #tpu.memory_space<vmem>>, vector<1x8xf32>
    tpu.vector_store %arg3[%c0_13, %c0_14], %43 {strides = array<i32>} : memref<1x8xf32, #tpu.memory_space<vmem>>, vector<1x8xf32>,
    return
  }
  func.func @transform_0(%arg0: i32) -> (i32, i32) {
    %c0_i32 = arith.constant 0 : i32
    %c0_i32_0 = arith.constant 0 : i32
    return %arg0, %c0_i32 : i32, i32
  }
  func.func @transform_1(%arg0: i32) -> (i32, i32) {
    %c0_i32 = arith.constant 0 : i32
    %c0_i32_0 = arith.constant 0 : i32
    return %arg0, %c0_i32 : i32, i32
  }
  func.func @transform_2(%arg0: i32) -> (i32, i32) {
    %c0_i32 = arith.constant 0 : i32
    %c0_i32_0 = arith.constant 0 : i32
    return %c0_i32, %arg0 : i32, i32
  }
}

</mosaic_0001>

<llo_original>
// kernel: tpu_custom_call.1
$region0: #{tpu_custom_call.1}
  #allocation0 [shape = 'u32[]', space=smem, size = 0x4, offset = 0x4, fixed_abs, tag = 'smem constant byte address 0x4 - core index']
  #allocation1 [shape = 'u32[72,128]{1,0:T(1,128)}', space=vmem, size = 0x9000, scoped, tag = 'internal scratch']
  %s0 = inlined_call_operand.hbm [shape: f32[8,32], index: 0, kind: input, shape index: {}]
  %s1 = inlined_call_operand.hbm [shape: f32[8,32], index: 1, kind: input, shape index: {}]
  %s2 = inlined_call_operand.hbm [shape: f32[1,8], index: 2, kind: output, shape index: {}]
  %s3 = sld [smem:[#allocation0]]
  $region26: #{tpu_custom_call.1} parent=0
    _
  %s5 = ssub.s32 1, %s3
  %s6 = scalar_select 0, %s5, %s3
  $region1: #{tpu_custom_call.1} parent=0
    #allocation2 [shape = 'u8[4096]{0}', space=vmem, size = 0x1000, scoped, tag = 'input window, operand 0, single buffered']
    #allocation3 [shape = 's32[1]{0}', space=sflag, size = 0x4, scoped, tag = 'scoped memory for tpu_custom_call.1']
    #allocation4 [shape = 's32[1]{0}', space=sflag, size = 0x4, scoped, tag = 'scoped memory for tpu_custom_call.1']
    #allocation5 [shape = 'u8[4096]{0}', space=vmem, size = 0x1000, scoped, tag = 'input window, operand 1, single buffered']
    #allocation6 [shape = 's32[1]{0}', space=sflag, size = 0x4, scoped, tag = 'scoped memory for tpu_custom_call.1']
    #allocation7 [shape = 'u8[512]{0}', space=vmem, size = 0x400, scoped, tag = 'output window, operand 0, single buffered']
    %7 = vsyncpa [#allocation3], 0
    %8 = vsyncpa [#allocation6], 0
    %9 = vsyncpa [#allocation4], 0
    // Predicated region
    $region2: #{tpu_custom_call.1} parent=1 // pred_check
      _
    $region3: #{tpu_custom_call.1} parent=1 // pred_check_branch
      %11 = sbr.rel (0) target = $region5
    $region4: #{tpu_custom_call.1} parent=1 // pred_region
      %13 = vsyncadd [#allocation3], 0
      %s15 = sshll.u32 %s0, 4
      %s16 = int_to_ptr.hbm [resolvable:$true] %s15
      %s17 = sshll.u32 [#allocation2], 4
      %s18 = int_to_ptr.vmem [resolvable:$true] %s17
      %20 = dma.hbm_to_vmem [thread:$0]  %s16, 128, %s18, [#allocation3]
    $region5: #{tpu_custom_call.1} parent=1 // pred_fallthru
      _
    // Predicated region
    $region6: #{tpu_custom_call.1} parent=1 // pred_check
      _
    $region7: #{tpu_custom_call.1} parent=1 // pred_check_branch
      %22 = sbr.rel (0) target = $region9
    $region8: #{tpu_custom_call.1} parent=1 // pred_region
      %24 = vsyncadd [#allocation6], 0
      %s26 = sshll.u32 %s1, 4
      %s27 = int_to_ptr.hbm [resolvable:$true] %s26
      %s28 = sshll.u32 [#allocation5], 4
      %s29 = int_to_ptr.vmem [resolvable:$true] %s28
      %31 = dma.hbm_to_vmem [thread:$0]  %s27, 128, %s29, [#allocation6]
    $region9: #{tpu_custom_call.1} parent=1 // pred_fallthru
      _
    // Predicated region
    $region10: #{tpu_custom_call.1} parent=1 // pred_check
      _
    $region11: #{tpu_custom_call.1} parent=1 // pred_check_branch
      %33 = sbr.rel (0) target = $region13
    $region12: #{tpu_custom_call.1} parent=1 // pred_region
      %35 = dma.done [#allocation3], 128
    $region13: #{tpu_custom_call.1} parent=1 // pred_fallthru
      _
    // Predicated region
    $region14: #{tpu_custom_call.1} parent=1 // pred_check
      _
    $region15: #{tpu_custom_call.1} parent=1 // pred_check_branch
      %37 = sbr.rel (0) target = $region17
    $region16: #{tpu_custom_call.1} parent=1 // pred_region
      %39 = dma.done [#allocation6], 128
    $region17: #{tpu_custom_call.1} parent=1 // pred_fallthru
      _
    %v40 = vld [vmem:[#allocation2] sm:$0xff]
    %v41 = vld [vmem:[#allocation5] sm:$0xff]
    %vm42 = vcmask 261120
    %v43 = vsel %vm42, %v40, -inf
    %44 = vmax.xlane.f32.xlu0 %v43
    %v45 = vpop.xlane.xlu0 %44
    %v46 = vsub.f32 %v40, %v45
    %v47 = vmul.f32 %v46, 1.442695
    %v48 = vpow.pop %v47
    %v49 = vsel %vm42, %v48, 0.0
    %50 = vadd.xlane.f32.xlu0 %v49
    %v51 = vpop.xlane.xlu0 %50
    %v52 = vlog2.pop %v51
    %v53 = vmul.f32 %v52, 0.6931472
    %v54 = vadd.f32 %v45, %v53
    %v55 = vlaneseq
    %v56 = vand.u32 %v55, 127
    %v57 = vsel %vm42, %v41, -inf
    %58 = vmax.xlane.f32.xlu0 %v57
    %v59 = vpop.xlane.xlu0 %58
    %vm60 = vcmp.eq.f32.partialorder %v41, %v59
    %v61 = vsel %vm60, %v56, 32
    %v62 = vsel %vm42, %v61, 2147483647
    %v63 = vand.u32 %v62, 65535
    %v64 = vshra.s32 %v62, 16
    %v65 = vcvt.s32.f32 %v63
    %v66 = vcvt.s32.f32 %v64
    %67 = vmin.xlane.f32.xlu0 %v66
    %v68 = vpop.xlane.xlu0 %67
    %vm69 = vcmp.eq.f32.partialorder %v66, %v68
    %v70 = vsel %vm69, %v65, inf
    %71 = vmin.xlane.f32.xlu0 %v70
    %v72 = vpop.xlane.xlu0 %71
    %v73 = vcvt.f32.s32 %v72
    %v74 = vcvt.f32.s32 %v68
    %v75 = vshll.u32 %v74, 16
    %v76 = vadd.s32 %v75, %v73
    %vm77 = vcmp.eq.s32.totalorder %v56, %v76
    %v78 = vsel %vm77, %v40, 0.0
    %v79 = vsel %vm42, %v78, 0.0
    %80 = vadd.xlane.f32.xlu0 %v79
    %v81 = vpop.xlane.xlu0 %80
    %vm82 = vcmp.eq.f32.partialorder %v41, 1.0
    %v83 = vsub.f32 0.0, %v41
    %v84 = vsel %vm82, 1.0, %v83
    %v85 = vsub.f32 %v54, %v81
    %v86 = vmul.f32 %v85, %v84
    %s87 = smul.u32 0, 8
    %v88 = vlaneseq
    %v89 = vshrl.u32 %v88, 7
    %v90 = vstv %s87
    %v91 = vadd.s32 %v90, %v89
    %vm92 = vcmp.lt.s32.totalorder %v91, 8
    %v93 = vsel %vm92, %v86, 0.0
    %95 = vset.pattern.permute.xlu0 0
    %96 = vperm.xlu0 %95, %v93
    %v97 = vpop.permute.xlu0 %96
    %v98 = vperm.slane %v97, %v56
    %vm100 = vcmask 57344
    %101 = vst.msk [vmem:[#allocation7] sm:$0x1] %vm100, %v98
    // Predicated region
    $region18: #{tpu_custom_call.1} parent=1 // pred_check
      _
    $region19: #{tpu_custom_call.1} parent=1 // pred_check_branch
      %103 = sbr.rel (0) target = $region21
    $region20: #{tpu_custom_call.1} parent=1 // pred_region
      %105 = vsyncadd [#allocation4], 0
      %s107 = sshll.u32 [#allocation7], 4
      %s108 = int_to_ptr.vmem [resolvable:$true] %s107
      %s109 = sshll.u32 %s2, 4
      %s110 = int_to_ptr.hbm [resolvable:$true] %s109
      %112 = dma.vmem_to_hbm [thread:$0]  %s108, 16, %s110, [#allocation4]
    $region21: #{tpu_custom_call.1} parent=1 // pred_fallthru
      _
    // Predicated region
    $region22: #{tpu_custom_call.1} parent=1 // pred_check
      _
    $region23: #{tpu_custom_call.1} parent=1 // pred_check_branch
      %114 = sbr.rel (0) target = $region25
    $region24: #{tpu_custom_call.1} parent=1 // pred_region
      %116 = dma.done [#allocation4], 16
    $region25: #{tpu_custom_call.1} parent=1 // pred_fallthru
      _
    %117 = vsyncpa [#allocation3], 1
    %118 = vsyncpa [#allocation6], 1
    %119 = vsyncpa [#allocation4], 1

</llo_original>
